<compile_context>
chip_gen: v5e
topology: v5e:2x2
jax: 0.10.0
libtpu: 0.0.40
codegen_flags: <defaults>
</compile_context>

<pallas_src>
import jax
import jax.numpy as jnp
from jax.experimental import pallas as pl
from jax.experimental.pallas import tpu as pltpu

LN_EPS = 1e-5


def pooler_kernel(cls_ref, gamma_ref, beta_ref, w_ref, b_ref, out_ref):
    # cls_ref:   (TB, H_in)   CLS rows (seq position 0), native dtype
    # gamma_ref: (1, H_in)    LayerNorm weight
    # beta_ref:  (1, H_in)    LayerNorm bias
    # w_ref:     (TN, H_in)   Linear weight tile, PyTorch (out, in) layout, native dtype
    # b_ref:     (1, TN)      Linear bias tile
    # out_ref:   (TB, TN)
    x = cls_ref[...].astype(jnp.float32)

    # LayerNorm over the hidden axis -- statistics always in f32.
    mean = jnp.mean(x, axis=-1, keepdims=True)
    centered = x - mean
    var = jnp.mean(centered * centered, axis=-1, keepdims=True)
    xn = centered * jax.lax.rsqrt(var + LN_EPS)
    xn = xn * gamma_ref[...].astype(jnp.float32) + beta_ref[...].astype(jnp.float32)

    # Dense: contract H_in of both operands (== xn @ W.T) on the MXU.
    # Matmul runs in the weight's native dtype with f32 accumulation.
    w = w_ref[...]
    y = jax.lax.dot_general(
        xn.astype(w.dtype), w,
        dimension_numbers=(((1,), (1,)), ((), ())),
        preferred_element_type=jnp.float32)
    y = y + b_ref[...].astype(jnp.float32)
    out_ref[...] = jnp.tanh(y).astype(out_ref.dtype)


def pooler_forward(x, ln_gamma, ln_beta, dense_w, dense_b, *, tb=256, tn=256):
    """x: (B, S, H_in); dense_w: (H_out, H_in) (PyTorch layout); returns (B, H_out)."""
    B, S, H_in = x.shape
    H_out = dense_w.shape[0]

    # Tile sizes: full dim when small (keeps BlockSpec legal for any size),
    # otherwise 8-/128-aligned tiles so edge tiles and stores stay unmasked.
    TB = B if B <= tb else tb          # tb is a multiple of 8
    TN = H_out if H_out <= tn else tn  # tn is a multiple of 128

    gamma2d = ln_gamma.reshape(1, H_in)
    beta2d = ln_beta.reshape(1, H_in)
    bias2d = dense_b.reshape(1, H_out)

    # Fuse CLS-token extraction into the kernel's input DMA: view x as
    # (B, S*H_in) (free reshape) and read only block-column 0 of width H_in,
    # i.e. exactly x[:, 0, :].  Requires a 128-aligned H_in for the lane dim.
    if (H_in % 128 == 0) or (S == 1):
        x_in = x.reshape(B, S * H_in)
    else:
        x_in = x[:, 0, :]  # fallback: wrapper-side slice for odd hidden sizes
    x_spec = pl.BlockSpec((TB, H_in), lambda i, j: (i, 0))

    grid = (pl.cdiv(B, TB), pl.cdiv(H_out, TN))

    out = pl.pallas_call(
        pooler_kernel,
        out_shape=jax.ShapeDtypeStruct((B, H_out), x.dtype),
        grid_spec=pltpu.PrefetchScalarGridSpec(
            num_scalar_prefetch=0,
            grid=grid,
            in_specs=[
                x_spec,                                            # CLS rows
                pl.BlockSpec((1, H_in), lambda i, j: (0, 0)),      # LN gamma
                pl.BlockSpec((1, H_in), lambda i, j: (0, 0)),      # LN beta
                pl.BlockSpec((TN, H_in), lambda i, j: (j, 0)),     # W tile (out, in)
                pl.BlockSpec((1, TN), lambda i, j: (0, j)),        # bias tile
            ],
            out_specs=pl.BlockSpec((TB, TN), lambda i, j: (i, j)),
        ),
        # Independent output tiles -> both axes parallel (megacore sharding on v7x).
        compiler_params=pltpu.CompilerParams(
            dimension_semantics=("parallel", "parallel")),
    )(x_in, gamma2d, beta2d, dense_w, bias2d)
    return out


def _reference(x, ln_gamma, ln_beta, dense_w, dense_b):
    cls_rep = x[:, 0, :].astype(jnp.float32)
    mean = jnp.mean(cls_rep, axis=-1, keepdims=True)
    var = jnp.mean((cls_rep - mean) ** 2, axis=-1, keepdims=True)
    xn = (cls_rep - mean) / jnp.sqrt(var + LN_EPS)
    xn = xn * ln_gamma.astype(jnp.float32) + ln_beta.astype(jnp.float32)
    y = jnp.dot(xn, dense_w.astype(jnp.float32).T,
                precision=jax.lax.Precision.HIGHEST)
    y = y + dense_b.astype(jnp.float32)
    return jnp.tanh(y)


if __name__ == "__main__":
    # Small but tiling-exercising shapes: H_in is 128-aligned (fused CLS DMA path)
    # and H_out > TN so the N axis actually streams weight tiles (grid = (1, 2)).
    B, S, H_in, H_out = 16, 8, 256, 512

    key = jax.random.PRNGKey(0)
    k_x, k_w, k_b, k_g, k_bt = jax.random.split(key, 5)

    x = jax.random.normal(k_x, (B, S, H_in), dtype=jnp.float32)

    # Deterministic parameter init (synthetic, not a checkpoint).
    ln_gamma = 1.0 + 0.01 * jax.random.normal(k_g, (H_in,), dtype=jnp.float32)
    ln_beta = 0.01 * jax.random.normal(k_bt, (H_in,), dtype=jnp.float32)
    dense_w = jax.random.normal(k_w, (H_out, H_in), dtype=jnp.float32) * 0.02
    dense_b = jax.random.normal(k_b, (H_out,), dtype=jnp.float32) * 0.02

    ref = _reference(x, ln_gamma, ln_beta, dense_w, dense_b)

    # f32 parameters / activations.
    out = jax.block_until_ready(
        pooler_forward(x, ln_gamma, ln_beta, dense_w, dense_b))
    assert out.shape == (B, H_out), out.shape
    err = float(jnp.max(jnp.abs(out.astype(jnp.float32) - ref)))
    assert err < 2e-3, err

    # bf16 parameters / activations (mixed precision: LN stats f32, bf16 MXU
    # matmul with f32 accumulation) -- looser tolerance by construction.
    out_bf16 = jax.block_until_ready(pooler_forward(
        x.astype(jnp.bfloat16),
        ln_gamma.astype(jnp.bfloat16),
        ln_beta.astype(jnp.bfloat16),
        dense_w.astype(jnp.bfloat16),
        dense_b.astype(jnp.bfloat16)))
    assert out_bf16.shape == (B, H_out)
    assert out_bf16.dtype == jnp.bfloat16
    err_bf16 = float(jnp.max(jnp.abs(out_bf16.astype(jnp.float32) - ref)))
    assert err_bf16 < 3e-2, err_bf16

    print("KERNEL_OK")
</pallas_src>

<mosaic_0001>
module attributes {stable_mosaic.version = 11 : i64} {
  func.func @pooler_kernel(%arg0: i32, %arg1: i32, %arg2: memref<16x256xf32, #tpu.memory_space<vmem>>, %arg3: memref<1x256xf32, #tpu.memory_space<vmem>>, %arg4: memref<1x256xf32, #tpu.memory_space<vmem>>, %arg5: memref<256x256xf32, #tpu.memory_space<vmem>>, %arg6: memref<1x256xf32, #tpu.memory_space<vmem>>, %arg7: memref<16x256xf32, #tpu.memory_space<vmem>>) attributes {dimension_semantics = [#tpu.dimension_semantics<parallel>, #tpu.dimension_semantics<parallel>], iteration_bounds = array<i64: 1, 2>, scalar_prefetch = 0 : i64, scratch_operands = 0 : i64, tpu.core_type = #tpu.core_type<tc>, window_params = [{transform_indices = @transform_0, window_bounds = array<i64: 16, 256>}, {pipeline_mode = #tpu.pipeline_mode<synchronous>, transform_indices = @transform_1, window_bounds = array<i64: 1, 256>}, {pipeline_mode = #tpu.pipeline_mode<synchronous>, transform_indices = @transform_2, window_bounds = array<i64: 1, 256>}, {transform_indices = @transform_3, window_bounds = array<i64: 256, 256>}, {transform_indices = @transform_4, window_bounds = array<i64: 1, 256>}, {transform_indices = @transform_5, window_bounds = array<i64: 16, 256>}]} {
    %c0 = arith.constant 0 : index
    %c0_0 = arith.constant 0 : index
    %0 = vector.load %arg2[%c0, %c0_0] : memref<16x256xf32, #tpu.memory_space<vmem>>, vector<16x256xf32>
    %cst = arith.constant dense<0.000000e+00> : vector<16xf32>
    %1 = vector.multi_reduction <add>, %0, %cst [1] : vector<16x256xf32> to vector<16xf32>
    %2 = vector.shape_cast %1 : vector<16xf32> to vector<16x1xf32>
    %cst_1 = arith.constant 2.560000e+02 : f32
    %3 = vector.broadcast %cst_1 : f32 to vector<16x1xf32>
    %4 = arith.divf %2, %3 : vector<16x1xf32>
    %5 = vector.broadcast %4 : vector<16x1xf32> to vector<16x256xf32>
    %6 = arith.subf %0, %5 : vector<16x256xf32>
    %7 = arith.mulf %6, %6 : vector<16x256xf32>
    %cst_2 = arith.constant dense<0.000000e+00> : vector<16xf32>
    %8 = vector.multi_reduction <add>, %7, %cst_2 [1] : vector<16x256xf32> to vector<16xf32>
    %9 = vector.shape_cast %8 : vector<16xf32> to vector<16x1xf32>
    %cst_3 = arith.constant 2.560000e+02 : f32
    %10 = vector.broadcast %cst_3 : f32 to vector<16x1xf32>
    %11 = arith.divf %9, %10 : vector<16x1xf32>
    %cst_4 = arith.constant 9.99999974E-6 : f32
    %12 = vector.broadcast %cst_4 : f32 to vector<16x1xf32>
    %13 = arith.addf %11, %12 : vector<16x1xf32>
    %14 = math.rsqrt %13 : vector<16x1xf32>
    %15 = vector.broadcast %14 : vector<16x1xf32> to vector<16x256xf32>
    %16 = arith.mulf %6, %15 : vector<16x256xf32>
    %c0_5 = arith.constant 0 : index
    %c0_6 = arith.constant 0 : index
    %17 = vector.load %arg3[%c0_5, %c0_6] : memref<1x256xf32, #tpu.memory_space<vmem>>, vector<1x256xf32>
    %18 = vector.broadcast %17 : vector<1x256xf32> to vector<16x256xf32>
    %19 = arith.mulf %16, %18 : vector<16x256xf32>
    %c0_7 = arith.constant 0 : index
    %c0_8 = arith.constant 0 : index
    %20 = vector.load %arg4[%c0_7, %c0_8] : memref<1x256xf32, #tpu.memory_space<vmem>>, vector<1x256xf32>
    %21 = vector.broadcast %20 : vector<1x256xf32> to vector<16x256xf32>
    %22 = arith.addf %19, %21 : vector<16x256xf32>
    %c0_9 = arith.constant 0 : index
    %c0_10 = arith.constant 0 : index
    %23 = vector.load %arg5[%c0_9, %c0_10] : memref<256x256xf32, #tpu.memory_space<vmem>>, vector<256x256xf32>
    %cst_11 = arith.constant dense<0.000000e+00> : vector<16x256xf32>
    %24 = tpu.matmul %22, %23, %cst_11 {dimension_numbers = #tpu.dot_dimension_numbers<[1], [1], [0], [0], [0, 0, 1, 0], [], []>} : vector<16x256xf32>, vector<256x256xf32>, vector<16x256xf32> -> vector<16x256xf32>
    %c0_12 = arith.constant 0 : index
    %c0_13 = arith.constant 0 : index
    %25 = vector.load %arg6[%c0_12, %c0_13] : memref<1x256xf32, #tpu.memory_space<vmem>>, vector<1x256xf32>
    %26 = vector.broadcast %25 : vector<1x256xf32> to vector<16x256xf32>
    %27 = arith.addf %24, %26 : vector<16x256xf32>
    %28 = math.tanh %27 : vector<16x256xf32>
    %c0_14 = arith.constant 0 : index
    %c0_15 = arith.constant 0 : index
    %29 = vector.load %arg7[%c0_14, %c0_15] : memref<16x256xf32, #tpu.memory_space<vmem>>, vector<16x256xf32>
    tpu.vector_store %arg7[%c0_14, %c0_15], %28 {strides = array<i32>} : memref<16x256xf32, #tpu.memory_space<vmem>>, vector<16x256xf32>,
    return
  }
  func.func @transform_0(%arg0: i32, %arg1: i32) -> (i32, i32) {
    %c0_i32 = arith.constant 0 : i32
    %c0_i32_0 = arith.constant 0 : i32
    return %arg0, %c0_i32 : i32, i32
  }
  func.func @transform_1(%arg0: i32, %arg1: i32) -> (i32, i32) {
    %c0_i32 = arith.constant 0 : i32
    %c0_i32_0 = arith.constant 0 : i32
    %c0_i32_1 = arith.constant 0 : i32
    return %c0_i32, %c0_i32_0 : i32, i32
  }
  func.func @transform_2(%arg0: i32, %arg1: i32) -> (i32, i32) {
    %c0_i32 = arith.constant 0 : i32
    %c0_i32_0 = arith.constant 0 : i32
    %c0_i32_1 = arith.constant 0 : i32
    return %c0_i32, %c0_i32_0 : i32, i32
  }
  func.func @transform_3(%arg0: i32, %arg1: i32) -> (i32, i32) {
    %c0_i32 = arith.constant 0 : i32
    %c0_i32_0 = arith.constant 0 : i32
    return %arg1, %c0_i32 : i32, i32
  }
  func.func @transform_4(%arg0: i32, %arg1: i32) -> (i32, i32) {
    %c0_i32 = arith.constant 0 : i32
    %c0_i32_0 = arith.constant 0 : i32
    return %c0_i32, %arg1 : i32, i32
  }
  func.func @transform_5(%arg0: i32, %arg1: i32) -> (i32, i32) {
    %c0_i32 = arith.constant 0 : i32
    return %arg0, %arg1 : i32, i32
  }
}

</mosaic_0001>

<llo_original>
// kernel: tpu_custom_call.1
$region0: #{tpu_custom_call.1}
  #allocation0 [shape = 'u32[]', space=smem, size = 0x4, offset = 0x4, fixed_abs, tag = 'smem constant byte address 0x4 - core index']
  #allocation1 [shape = 'u32[72,128]{1,0:T(1,128)}', space=vmem, size = 0x9000, scoped, tag = 'internal scratch']
  %s0 = inlined_call_operand.hbm [shape: f32[16,2048], index: 0, kind: input, shape index: {}]
  %s1 = inlined_call_operand.hbm [shape: f32[1,256], index: 1, kind: input, shape index: {}]
  %s2 = inlined_call_operand.hbm [shape: f32[1,256], index: 2, kind: input, shape index: {}]
  %s3 = inlined_call_operand.hbm [shape: f32[512,256], index: 3, kind: input, shape index: {}]
  %s4 = inlined_call_operand.hbm [shape: f32[1,512], index: 4, kind: input, shape index: {}]
  %s5 = inlined_call_operand.hbm [shape: f32[16,512], index: 5, kind: output, shape index: {}]
  %s6 = sld [smem:[#allocation0]]
  $region73: #{tpu_custom_call.1} parent=0
    _
  %s8 = ssub.s32 1, %s6
  %s9 = scalar_select 0, %s8, %s6
  $region1: #{tpu_custom_call.1} parent=0
    #allocation2 [shape = 'u8[16384]{0}', space=vmem, size = 0x4000, scoped, tag = 'input window, operand 0, single buffered']
    #allocation3 [shape = 's32[2]{0}', space=sflag, size = 0x8, scoped, tag = 'scoped memory for tpu_custom_call.1']
    #allocation4 [shape = 's32[2]{0}', space=sflag, size = 0x8, scoped, tag = 'scoped memory for tpu_custom_call.1']
    #allocation5 [shape = 'u8[1024]{0}', space=vmem, size = 0x400, scoped, tag = 'input window, operand 1, single buffered']
    #allocation6 [shape = 's32[1]{0}', space=sflag, size = 0x4, scoped, tag = 'scoped memory for tpu_custom_call.1']
    #allocation7 [shape = 'u8[1024]{0}', space=vmem, size = 0x400, scoped, tag = 'input window, operand 2, single buffered']
    #allocation8 [shape = 'u8[524288]{0}', space=vmem, size = 0x80000, scoped, tag = 'input window, operand 3']
    #allocation9 [shape = 's32[2]{0}', space=sflag, size = 0x8, scoped, tag = 'scoped memory for tpu_custom_call.1']
    #allocation10 [shape = 'u8[2048]{0}', space=vmem, size = 0x800, scoped, tag = 'input window, operand 4']
    #allocation11 [shape = 'u8[32768]{0}', space=vmem, size = 0x8000, scoped, tag = 'output window, operand 0']
    %10 = vsyncpa [#allocation3], 0
    %11 = vsyncpa [#allocation6], 0
    %12 = vsyncpa [#allocation9], 0
    %s13 = scalar_lea.sflag [#allocation9], 1
    %14 = vsyncpa %s13, 0
    %15 = vsyncpa [#allocation4], 0
    %s16 = scalar_lea.sflag [#allocation4], 1
    %17 = vsyncpa %s16, 0
    loop: start=0, step=1, limit=4
    $region2: #{tpu_custom_call.1} parent=1 // loop_pre_header
      _
    $region3: #{tpu_custom_call.1} parent=1 // loop_header
      %s19 = sphi 0, %s23
      %p20 = scmp.ge.s32.totalorder %s19, 4
      %s26 = sphi 0, %s38
      %s27 = sphi 0, %s34
      %s28 = sphi 0, %s26
      %s29 = sphi 0, %s27
      %s30 = sphi 0, %s28
      %s31 = sphi 0, %s29
      %s41 = sphi 0, %s43
      %s44 = sphi 0, %s41
      %s45 = sphi 0, %s44
      %s61 = sphi 0, %s45
      %s65 = sphi 0, %s65
      %s67 = sphi 0, %s65
      %s68 = sphi 0, %s67
      %s82 = sphi 0, %s68
      %s86 = sphi 0, %s86
      %s88 = sphi 0, %s86
      %s89 = sphi 0, %s88
      %s103 = sphi 0, %s89
      %s109 = sphi 0, %s111
      %s112 = sphi 0, %s109
      %s113 = sphi 0, %s112
      %s129 = sphi 0, %s113
      %s135 = sphi 0, %s137
      %s138 = sphi 0, %s135
      %s139 = sphi 0, %s138
      %s155 = sphi 0, %s139
      %s163 = sphi 0, %s165
      %s166 = sphi 0, %s163
      %s167 = sphi 0, %s166
      %s183 = sphi 0, %s167
    $region4: #{tpu_custom_call.1} parent=1 // loop_header_branch
      %22 = sbr.rel (%p20) target = $region8
    $region5: #{tpu_custom_call.1} parent=1 // loop_body
      %s24 = ssub.s32 %s19, 1
      %s25 = ssub.s32 %s19, 2
      %s32 = sadd.s32 1, %s27
      %p33 = scmp.ge.s32.totalorder %s32, 2
      %s34 = scalar_select %p33, 0, %s32
      %s35 = sadd.s32 1, %s26
      %s36 = scalar_select %p33, %s35, %s26
      %p37 = scmp.ge.s32.totalorder %s36, 1
      %s38 = scalar_select %p37, 0, %s36
      %s39 = ssub.s32 %s26, %s38
      %p40 = scmp.eq.s32.totalorder %s39, 0
      %s42 = sadd.s32 %s41, 1
      %s43 = scalar_select %p40, %s41, %s42
      %p46 = pneg %p40
      %p47 = scmp.eq.s32.totalorder %s19, 1
      %p48 = por %p46, %p47
      %p49 = scmp.ne.s32.totalorder %s41, %s44
      %p50 = scmp.eq.s32.totalorder %s19, 0
      %p51 = por %p49, %p50
      %p52 = scmp.ne.s32.totalorder %s41, %s44
      %p53 = scmp.eq.s32.totalorder %s24, 1
      %p54 = por %p52, %p53
      %p55 = scmp.ne.s32.totalorder %s44, %s45
      %p56 = scmp.eq.s32.totalorder %s24, 0
      %p57 = por %p55, %p56
      %p58 = scmp.ne.s32.totalorder %s44, %s45
      %p59 = scmp.eq.s32.totalorder %s25, 1
      %p60 = por %p58, %p59
      %p62 = scmp.ne.s32.totalorder %s45, %s61
      %p63 = scmp.eq.s32.totalorder %s25, 0
      %p64 = por %p62, %p63
      %s66 = sadd.s32 %s65, 1
      %p69 = scmp.eq.s32.totalorder %s19, 1
      %p70 = scmp.ne.s32.totalorder %s65, %s67
      %p71 = scmp.eq.s32.totalorder %s19, 0
      %p72 = por %p70, %p71
      %p73 = scmp.ne.s32.totalorder %s65, %s67
      %p74 = scmp.eq.s32.totalorder %s24, 1
      %p75 = por %p73, %p74
      %p76 = scmp.ne.s32.totalorder %s67, %s68
      %p77 = scmp.eq.s32.totalorder %s24, 0
      %p78 = por %p76, %p77
      %p79 = scmp.ne.s32.totalorder %s67, %s68
      %p80 = scmp.eq.s32.totalorder %s25, 1
      %p81 = por %p79, %p80
      %p83 = scmp.ne.s32.totalorder %s68, %s82
      %p84 = scmp.eq.s32.totalorder %s25, 0
      %p85 = por %p83, %p84
      %s87 = sadd.s32 %s86, 1
      %p90 = scmp.eq.s32.totalorder %s19, 1
      %p91 = scmp.ne.s32.totalorder %s86, %s88
      %p92 = scmp.eq.s32.totalorder %s19, 0
      %p93 = por %p91, %p92
      %p94 = scmp.ne.s32.totalorder %s86, %s88
      %p95 = scmp.eq.s32.totalorder %s24, 1
      %p96 = por %p94, %p95
      %p97 = scmp.ne.s32.totalorder %s88, %s89
      %p98 = scmp.eq.s32.totalorder %s24, 0
      %p99 = por %p97, %p98
      %p100 = scmp.ne.s32.totalorder %s88, %s89
      %p101 = scmp.eq.s32.totalorder %s25, 1
      %p102 = por %p100, %p101
      %p104 = scmp.ne.s32.totalorder %s89, %s103
      %p105 = scmp.eq.s32.totalorder %s25, 0
      %p106 = por %p104, %p105
      %s107 = ssub.s32 %s27, %s34
      %p108 = scmp.eq.s32.totalorder %s107, 0
      %s110 = sadd.s32 %s109, 1
      %s111 = scalar_select %p108, %s109, %s110
      %p114 = pneg %p108
      %p115 = scmp.eq.s32.totalorder %s19, 1
      %p116 = por %p114, %p115
      %p117 = scmp.ne.s32.totalorder %s109, %s112
      %p118 = scmp.eq.s32.totalorder %s19, 0
      %p119 = por %p117, %p118
      %p120 = scmp.ne.s32.totalorder %s109, %s112
      %p121 = scmp.eq.s32.totalorder %s24, 1
      %p122 = por %p120, %p121
      %p123 = scmp.ne.s32.totalorder %s112, %s113
      %p124 = scmp.eq.s32.totalorder %s24, 0
      %p125 = por %p123, %p124
      %p126 = scmp.ne.s32.totalorder %s112, %s113
      %p127 = scmp.eq.s32.totalorder %s25, 1
      %p128 = por %p126, %p127
      %p130 = scmp.ne.s32.totalorder %s113, %s129
      %p131 = scmp.eq.s32.totalorder %s25, 0
      %p132 = por %p130, %p131
      %s133 = ssub.s32 %s27, %s34
      %p134 = scmp.eq.s32.totalorder %s133, 0
      %s136 = sadd.s32 %s135, 1
      %s137 = scalar_select %p134, %s135, %s136
      %p140 = pneg %p134
      %p141 = scmp.eq.s32.totalorder %s19, 1
      %p142 = por %p140, %p141
      %p143 = scmp.ne.s32.totalorder %s135, %s138
      %p144 = scmp.eq.s32.totalorder %s19, 0
      %p145 = por %p143, %p144
      %p146 = scmp.ne.s32.totalorder %s135, %s138
      %p147 = scmp.eq.s32.totalorder %s24, 1
      %p148 = por %p146, %p147
      %p149 = scmp.ne.s32.totalorder %s138, %s139
      %p150 = scmp.eq.s32.totalorder %s24, 0
      %p151 = por %p149, %p150
      %p152 = scmp.ne.s32.totalorder %s138, %s139
      %p153 = scmp.eq.s32.totalorder %s25, 1
      %p154 = por %p152, %p153
      %p156 = scmp.ne.s32.totalorder %s139, %s155
      %p157 = scmp.eq.s32.totalorder %s25, 0
      %p158 = por %p156, %p157
      %s159 = ssub.s32 %s26, %s38
      %s160 = ssub.s32 %s27, %s34
      %s161 = sor.u32 %s159, %s160
      %p162 = scmp.eq.s32.totalorder %s161, 0
      %s164 = sadd.s32 %s163, 1
      %s165 = scalar_select %p162, %s163, %s164
      %p168 = pneg %p162
      %p169 = scmp.eq.s32.totalorder %s19, 1
      %p170 = por %p168, %p169
      %p171 = scmp.ne.s32.totalorder %s163, %s166
      %p172 = scmp.eq.s32.totalorder %s19, 0
      %p173 = por %p171, %p172
      %p174 = scmp.ne.s32.totalorder %s163, %s166
      %p175 = scmp.eq.s32.totalorder %s24, 1
      %p176 = por %p174, %p175
      %p177 = scmp.ne.s32.totalorder %s166, %s167
      %p178 = scmp.eq.s32.totalorder %s24, 0
      %p179 = por %p177, %p178
      %p180 = scmp.ne.s32.totalorder %s166, %s167
      %p181 = scmp.eq.s32.totalorder %s25, 1
      %p182 = por %p180, %p181
      %p184 = scmp.ne.s32.totalorder %s167, %s183
      %p185 = scmp.eq.s32.totalorder %s25, 0
      %p186 = por %p184, %p185
      %p187 = scmp.le.s32.totalorder 1, %s19
      %p188 = scmp.lt.s32.totalorder %s19, 3
      %p189 = pnand %p187, %p188
      %p190 = pneg %p189
      // Predicated region
      $region9: #{tpu_custom_call.1} parent=5 // pred_check
        _
      $region10: #{tpu_custom_call.1} parent=5 // pred_check_branch
        %192 = sbr.rel (%p189) target = $region12
      $region11: #{tpu_custom_call.1} parent=5 // pred_region
        %s193 = ssub.s32 %s19, 1
        // Predicated region
        $region13: #{tpu_custom_call.1} parent=11 // pred_check
          %p194 = pneg %p57
        $region14: #{tpu_custom_call.1} parent=11 // pred_check_branch
          %196 = sbr.rel (%p194) target = $region16
        $region15: #{tpu_custom_call.1} parent=11 // pred_region
          %s197 = smul.u32 2, %s28
          %199 = vsyncadd [#allocation3], 0
          %s200 = smul.addr %s197, 16
          %s201 = smul.addr %s200, 8
          %s202 = scalar_lea.hbm %s0, %s201
          %s203 = sshll.u32 %s202, 4
          %s204 = int_to_ptr.hbm [resolvable:$true] %s203
          %s205 = sshll.u32 [#allocation2], 4
          %s206 = int_to_ptr.vmem [resolvable:$true] %s205
          %211 = dma.hbm_to_vmem [thread:$0]  %s204, 512, %s206, [#allocation3], 2048, 256, 16
        $region16: #{tpu_custom_call.1} parent=11 // pred_fallthru
          _
        // Predicated region
        $region17: #{tpu_custom_call.1} parent=11 // pred_check
          %p212 = pneg %p78
        $region18: #{tpu_custom_call.1} parent=11 // pred_check_branch
          %214 = sbr.rel (%p212) target = $region20
        $region19: #{tpu_custom_call.1} parent=11 // pred_region
          %216 = vsyncadd [#allocation6], 0
          %s218 = sshll.u32 %s1, 4
          %s219 = int_to_ptr.hbm [resolvable:$true] %s218
          %s220 = sshll.u32 [#allocation5], 4
          %s221 = int_to_ptr.vmem [resolvable:$true] %s220
          %223 = dma.hbm_to_vmem [thread:$0]  %s219, 32, %s221, [#allocation6]
        $region20: #{tpu_custom_call.1} parent=11 // pred_fallthru
          _
        // Predicated region
        $region21: #{tpu_custom_call.1} parent=11 // pred_check
          %p224 = pneg %p99
        $region22: #{tpu_custom_call.1} parent=11 // pred_check_branch
          %226 = sbr.rel (%p224) target = $region24
        $region23: #{tpu_custom_call.1} parent=11 // pred_region
          %228 = vsyncadd [#allocation6], 0
          %s230 = sshll.u32 %s2, 4
          %s231 = int_to_ptr.hbm [resolvable:$true] %s230
          %s232 = sshll.u32 [#allocation7], 4
          %s233 = int_to_ptr.vmem [resolvable:$true] %s232
          %235 = dma.hbm_to_vmem [thread:$0]  %s231, 32, %s233, [#allocation6]
        $region24: #{tpu_custom_call.1} parent=11 // pred_fallthru
          _
      $region12: #{tpu_custom_call.1} parent=5 // pred_fallthru
        _
      %p236 = scmp.lt.s32.totalorder %s19, 2
      // Predicated region
      $region25: #{tpu_custom_call.1} parent=5 // pred_check
        %p237 = pneg %p236
      $region26: #{tpu_custom_call.1} parent=5 // pred_check_branch
        %239 = sbr.rel (%p237) target = $region28
      $region27: #{tpu_custom_call.1} parent=5 // pred_region
        // Predicated region
        $region29: #{tpu_custom_call.1} parent=27 // pred_check
          %p240 = pneg %p119
        $region30: #{tpu_custom_call.1} parent=27 // pred_check_branch
          %242 = sbr.rel (%p240) target = $region32
        $region31: #{tpu_custom_call.1} parent=27 // pred_region
          %s243 = sand.u32 %s19, 1
          %s244 = scalar_lea.sflag [#allocation9], %s243
          %s245 = sand.u32 %s109, 1
          %s246 = smul.addr %s245, 512
          %s247 = scalar_lea.vmem [#allocation8], %s246
          %s248 = smul.u32 32, %s27
          %250 = vsyncadd %s244, 0
          %s251 = smul.addr %s248, 2
          %s252 = smul.addr %s251, 8
          %s253 = scalar_lea.hbm %s3, %s252
          %s254 = sshll.u32 %s253, 4
          %s255 = int_to_ptr.hbm [resolvable:$true] %s254
          %s256 = sshll.u32 %s247, 4
          %s257 = int_to_ptr.vmem [resolvable:$true] %s256
          %262 = dma.hbm_to_vmem [thread:$0]  %s255, 8192, %s257, %s244, 256, 256, 16
        $region32: #{tpu_custom_call.1} parent=27 // pred_fallthru
          _
        // Predicated region
        $region33: #{tpu_custom_call.1} parent=27 // pred_check
          %p263 = pneg %p145
        $region34: #{tpu_custom_call.1} parent=27 // pred_check_branch
          %265 = sbr.rel (%p263) target = $region36
        $region35: #{tpu_custom_call.1} parent=27 // pred_region
          %s266 = sand.u32 %s19, 1
          %s267 = scalar_lea.sflag [#allocation9], %s266
          %s268 = sand.u32 %s135, 1
          %s269 = smul.addr %s268, 2
          %s270 = scalar_lea.vmem [#allocation10], %s269
          %s271 = smul.u32 2, %s27
          %273 = vsyncadd %s267, 0
          %s274 = scalar_lea.hbm %s4, %s271
          %s276 = sshll.u32 %s274, 4
          %s277 = int_to_ptr.hbm [resolvable:$true] %s276
          %s278 = sshll.u32 %s270, 4
          %s279 = int_to_ptr.vmem [resolvable:$true] %s278
          %281 = dma.hbm_to_vmem [thread:$0]  %s277, 32, %s279, %s267
        $region36: #{tpu_custom_call.1} parent=27 // pred_fallthru
          _
      $region28: #{tpu_custom_call.1} parent=5 // pred_fallthru
        _
      %p282 = scmp.le.s32.totalorder 1, %s19
      %p283 = scmp.lt.s32.totalorder %s19, 3
      %p284 = pnand %p282, %p283
      %p285 = pneg %p284
      // Predicated region
      $region37: #{tpu_custom_call.1} parent=5 // pred_check
        _
      $region38: #{tpu_custom_call.1} parent=5 // pred_check_branch
        %287 = sbr.rel (%p284) target = $region40
      $region39: #{tpu_custom_call.1} parent=5 // pred_region
        %s288 = ssub.s32 %s19, 1
        // Predicated region
        $region41: #{tpu_custom_call.1} parent=39 // pred_check
          %p289 = pneg %p57
        $region42: #{tpu_custom_call.1} parent=39 // pred_check_branch
          %291 = sbr.rel (%p289) target = $region44
        $region43: #{tpu_custom_call.1} parent=39 // pred_region
          %293 = dma.done [#allocation3], 512
        $region44: #{tpu_custom_call.1} parent=39 // pred_fallthru
          _
        // Predicated region
        $region45: #{tpu_custom_call.1} parent=39 // pred_check
          %p294 = pneg %p78
        $region46: #{tpu_custom_call.1} parent=39 // pred_check_branch
          %296 = sbr.rel (%p294) target = $region48
        $region47: #{tpu_custom_call.1} parent=39 // pred_region
          %298 = dma.done [#allocation6], 32
        $region48: #{tpu_custom_call.1} parent=39 // pred_fallthru
          _
        // Predicated region
        $region49: #{tpu_custom_call.1} parent=39 // pred_check
          %p299 = pneg %p99
        $region50: #{tpu_custom_call.1} parent=39 // pred_check_branch
          %301 = sbr.rel (%p299) target = $region52
        $region51: #{tpu_custom_call.1} parent=39 // pred_region
          %303 = dma.done [#allocation6], 32
        $region52: #{tpu_custom_call.1} parent=39 // pred_fallthru
          _
        %s304 = sand.u32 %s24, 1
        %s305 = scalar_lea.sflag [#allocation9], %s304
        %s306 = sand.u32 %s112, 1
        %s307 = smul.addr %s306, 512
        %s308 = scalar_lea.vmem [#allocation8], %s307
        // Predicated region
        $region53: #{tpu_custom_call.1} parent=39 // pred_check
          %p309 = pneg %p125
        $region54: #{tpu_custom_call.1} parent=39 // pred_check_branch
          %311 = sbr.rel (%p309) target = $region56
        $region55: #{tpu_custom_call.1} parent=39 // pred_region
          %313 = dma.done %s305, 8192
        $region56: #{tpu_custom_call.1} parent=39 // pred_fallthru
          _
        %s314 = sand.u32 %s24, 1
        %s315 = scalar_lea.sflag [#allocation9], %s314
        %s316 = sand.u32 %s138, 1
        %s317 = smul.addr %s316, 2
        %s318 = scalar_lea.vmem [#allocation10], %s317
        // Predicated region
        $region57: #{tpu_custom_call.1} parent=39 // pred_check
          %p319 = pneg %p151
        $region58: #{tpu_custom_call.1} parent=39 // pred_check_branch
          %321 = sbr.rel (%p319) target = $region60
        $region59: #{tpu_custom_call.1} parent=39 // pred_region
          %323 = dma.done %s315, 32
        $region60: #{tpu_custom_call.1} parent=39 // pred_fallthru
          _
        %p324 = pneg %p57
        %p325 = pneg %p54
        %p326 = pneg %p78
        %p327 = pneg %p75
        %p328 = pneg %p99
        %p329 = pneg %p96
        %s330 = sand.u32 %s24, 1
        %s331 = scalar_lea.sflag [#allocation9], %s330
        %s332 = sand.u32 %s112, 1
        %s333 = smul.addr %s332, 512
        %s334 = scalar_lea.vmem [#allocation8], %s333
        %p335 = pneg %p125
        %p336 = pneg %p122
        %s337 = sand.u32 %s24, 1
        %s338 = scalar_lea.sflag [#allocation9], %s337
        %s339 = sand.u32 %s138, 1
        %s340 = smul.addr %s339, 2
        %s341 = scalar_lea.vmem [#allocation10], %s340
        %p342 = pneg %p151
        %p343 = pneg %p148
        %p344 = pneg %p179
        %p345 = pneg %p176
        %s346 = sand.u32 %s166, 1
        %s347 = scalar_lea.sflag [#allocation4], %s346
        %s348 = sand.u32 %s166, 1
        %s349 = smul.addr %s348, 32
        %s350 = scalar_lea.vmem [#allocation11], %s349
        %s351 = smul.u32 2, %s28
        %s352 = smul.u32 32, %s29
        %s353 = smul.u32 2, %s29
        %s354 = smul.u32 2, %s28
        %s355 = smul.u32 2, %s29
        %v356 = vld [vmem:[#allocation2] sm:$0xff]
        %v357 = vld [vmem:[#allocation2 + $0x8] sm:$0xff]
        %v358 = vld [vmem:[#allocation2 + $0x10] sm:$0xff]
        %v359 = vld [vmem:[#allocation2 + $0x18] sm:$0xff]
        %v360 = vadd.f32 %v356, %v357
        %361 = vadd.xlane.f32.xlu0 %v360
        %v362 = vpop.xlane.xlu0 %361
        %v363 = vadd.f32 %v358, %v359
        %364 = vadd.xlane.f32.xlu0 %v363
        %v365 = vpop.xlane.xlu0 %364
        %v366 = vrcp.pop 256.0
        %v367 = vmul.f32 256.0, %v366
        %v368 = vsub.f32 1.0, %v367
        %v369 = vmul.f32 %v366, %v368
        %v370 = vadd.f32 %v366, %v369
        %vm371 = vweird.f32 %v366
        %v372 = vsel %vm371, %v366, %v370
        %v373 = vmul.f32 %v362, %v372
        %v374 = vmul.f32 %v365, %v372
        %v375 = vsub.f32 %v356, %v373
        %v376 = vsub.f32 %v357, %v373
        %v377 = vsub.f32 %v358, %v374
        %v378 = vsub.f32 %v359, %v374
        %v379 = vmul.f32 %v375, %v375
        %v380 = vmul.f32 %v376, %v376
        %v381 = vmul.f32 %v377, %v377
        %v382 = vmul.f32 %v378, %v378
        %v383 = vadd.f32 %v379, %v380
        %384 = vadd.xlane.f32.xlu0 %v383
        %v385 = vpop.xlane.xlu0 %384
        %v386 = vadd.f32 %v381, %v382
        %387 = vadd.xlane.f32.xlu0 %v386
        %v388 = vpop.xlane.xlu0 %387
        %v389 = vmul.f32 %v385, %v372
        %v390 = vmul.f32 %v388, %v372
        %v391 = vadd.f32 %v389, 1e-05
        %v392 = vadd.f32 %v390, 1e-05
        %v393 = vrsqrt.pop %v391
        %v394 = vmul.f32 %v393, %v391
        %v395 = vmul.f32 %v394, %v393
        %v396 = vmul.f32 0.5, %v395
        %v397 = vsub.f32 1.5, %v396
        %v398 = vmul.f32 %v393, %v397
        %vm399 = vweird.f32 %v391
        %vm400 = vweird.f32 %v393
        %vm401 = vmor %vm399, %vm400
        %v402 = vsel %vm401, %v393, %v398
        %v403 = vrsqrt.pop %v392
        %v404 = vmul.f32 %v403, %v392
        %v405 = vmul.f32 %v404, %v403
        %v406 = vmul.f32 0.5, %v405
        %v407 = vsub.f32 1.5, %v406
        %v408 = vmul.f32 %v403, %v407
        %vm409 = vweird.f32 %v392
        %vm410 = vweird.f32 %v403
        %vm411 = vmor %vm409, %vm410
        %v412 = vsel %vm411, %v403, %v408
        %v413 = vmul.f32 %v375, %v402
        %v414 = vmul.f32 %v376, %v402
        %v415 = vmul.f32 %v377, %v412
        %v416 = vmul.f32 %v378, %v412
        %v417 = vld [vmem:[#allocation5] sm:$0x3]
        %v419 = vperm.slane %v417, 0
        %v420 = vperm.slane %v417, 1
        %v423 = vmul.f32 %v413, %v419
        %v424 = vmul.f32 %v414, %v420
        %v425 = vmul.f32 %v415, %v419
        %v426 = vmul.f32 %v416, %v420
        %v427 = vld [vmem:[#allocation7] sm:$0x3]
        %v429 = vperm.slane %v427, 0
        %v430 = vperm.slane %v427, 1
        %v433 = vadd.f32 %v423, %v429
        %v434 = vadd.f32 %v424, %v430
        %v435 = vadd.f32 %v425, %v429
        %v436 = vadd.f32 %v426, %v430
        %v437 = vld [vmem:[%s308] sm:$0xff]
        %v438 = vld [vmem:[%s308 + $0x8] sm:$0xff]
        %v439 = vld [vmem:[%s308 + $0x10] sm:$0xff]
        %v440 = vld [vmem:[%s308 + $0x18] sm:$0xff]
        %v441 = vld [vmem:[%s308 + $0x20] sm:$0xff]
        %v442 = vld [vmem:[%s308 + $0x28] sm:$0xff]
        %v443 = vld [vmem:[%s308 + $0x30] sm:$0xff]
        %v444 = vld [vmem:[%s308 + $0x38] sm:$0xff]
        %v445 = vld [vmem:[%s308 + $0x40] sm:$0xff]
        %v446 = vld [vmem:[%s308 + $0x48] sm:$0xff]
        %v447 = vld [vmem:[%s308 + $0x50] sm:$0xff]
        %v448 = vld [vmem:[%s308 + $0x58] sm:$0xff]
        %v449 = vld [vmem:[%s308 + $0x60] sm:$0xff]
        %v450 = vld [vmem:[%s308 + $0x68] sm:$0xff]
        %v451 = vld [vmem:[%s308 + $0x70] sm:$0xff]
        %v452 = vld [vmem:[%s308 + $0x78] sm:$0xff]
        %v453 = vld [vmem:[%s308 + $0x80] sm:$0xff]
        %v454 = vld [vmem:[%s308 + $0x88] sm:$0xff]
        %v455 = vld [vmem:[%s308 + $0x90] sm:$0xff]
        %v456 = vld [vmem:[%s308 + $0x98] sm:$0xff]
        %v457 = vld [vmem:[%s308 + $0xa0] sm:$0xff]
        %v458 = vld [vmem:[%s308 + $0xa8] sm:$0xff]
        %v459 = vld [vmem:[%s308 + $0xb0] sm:$0xff]
        %v460 = vld [vmem:[%s308 + $0xb8] sm:$0xff]
        %v461 = vld [vmem:[%s308 + $0xc0] sm:$0xff]
        %v462 = vld [vmem:[%s308 + $0xc8] sm:$0xff]
        %v463 = vld [vmem:[%s308 + $0xd0] sm:$0xff]
        %v464 = vld [vmem:[%s308 + $0xd8] sm:$0xff]
        %v465 = vld [vmem:[%s308 + $0xe0] sm:$0xff]
        %v466 = vld [vmem:[%s308 + $0xe8] sm:$0xff]
        %v467 = vld [vmem:[%s308 + $0xf0] sm:$0xff]
        %v468 = vld [vmem:[%s308 + $0xf8] sm:$0xff]
        %v469 = vld [vmem:[%s308 + $0x100] sm:$0xff]
        %v470 = vld [vmem:[%s308 + $0x108] sm:$0xff]
        %v471 = vld [vmem:[%s308 + $0x110] sm:$0xff]
        %v472 = vld [vmem:[%s308 + $0x118] sm:$0xff]
        %v473 = vld [vmem:[%s308 + $0x120] sm:$0xff]
        %v474 = vld [vmem:[%s308 + $0x128] sm:$0xff]
        %v475 = vld [vmem:[%s308 + $0x130] sm:$0xff]
        %v476 = vld [vmem:[%s308 + $0x138] sm:$0xff]
        %v477 = vld [vmem:[%s308 + $0x140] sm:$0xff]
        %v478 = vld [vmem:[%s308 + $0x148] sm:$0xff]
        %v479 = vld [vmem:[%s308 + $0x150] sm:$0xff]
        %v480 = vld [vmem:[%s308 + $0x158] sm:$0xff]
        %v481 = vld [vmem:[%s308 + $0x160] sm:$0xff]
        %v482 = vld [vmem:[%s308 + $0x168] sm:$0xff]
        %v483 = vld [vmem:[%s308 + $0x170] sm:$0xff]
        %v484 = vld [vmem:[%s308 + $0x178] sm:$0xff]
        %v485 = vld [vmem:[%s308 + $0x180] sm:$0xff]
        %v486 = vld [vmem:[%s308 + $0x188] sm:$0xff]
        %v487 = vld [vmem:[%s308 + $0x190] sm:$0xff]
        %v488 = vld [vmem:[%s308 + $0x198] sm:$0xff]
        %v489 = vld [vmem:[%s308 + $0x1a0] sm:$0xff]
        %v490 = vld [vmem:[%s308 + $0x1a8] sm:$0xff]
        %v491 = vld [vmem:[%s308 + $0x1b0] sm:$0xff]
        %v492 = vld [vmem:[%s308 + $0x1b8] sm:$0xff]
        %v493 = vld [vmem:[%s308 + $0x1c0] sm:$0xff]
        %v494 = vld [vmem:[%s308 + $0x1c8] sm:$0xff]
        %v495 = vld [vmem:[%s308 + $0x1d0] sm:$0xff]
        %v496 = vld [vmem:[%s308 + $0x1d8] sm:$0xff]
        %v497 = vld [vmem:[%s308 + $0x1e0] sm:$0xff]
        %v498 = vld [vmem:[%s308 + $0x1e8] sm:$0xff]
        %v499 = vld [vmem:[%s308 + $0x1f0] sm:$0xff]
        %v500 = vld [vmem:[%s308 + $0x1f8] sm:$0xff]
        %v501 = vld [vmem:[%s318] sm:$0x3]
        %v503 = vperm.slane %v501, 0
        %v504 = vperm.slane %v501, 1
        %507 = vmatpush.xpose.msra.mxu0 %v467
        %508 = vmatpush.xpose.msra.mxu0 %v465
        %509 = vmatpush.xpose.msra.mxu0 %v463
        %510 = vmatpush.xpose.msra.mxu0 %v461
        %511 = vmatpush.xpose.msra.mxu0 %v459
        %512 = vmatpush.xpose.msra.mxu0 %v457
        %513 = vmatpush.xpose.msra.mxu0 %v455
        %514 = vmatpush.xpose.msra.mxu0 %v453
        %515 = vmatpush.xpose.msra.mxu0 %v451
        %516 = vmatpush.xpose.msra.mxu0 %v449
        %517 = vmatpush.xpose.msra.mxu0 %v447
        %518 = vmatpush.xpose.msra.mxu0 %v445
        %519 = vmatpush.xpose.msra.mxu0 %v443
        %520 = vmatpush.xpose.msra.mxu0 %v441
        %521 = vmatpush.xpose.msra.mxu0 %v439
        %522 = vmatpush.xpose.msra.mxu0 %v437
        %523 = vmatmul.f32.gmra.mxu0 %v433
        %v524 = vpop.f32.mrf.mxu0
        %v525 = vadd.f32 %v503, %v524
        %526 = vmatmul.f32.gmra.mxu0 %v435
        %v527 = vpop.f32.mrf.mxu0
        %v528 = vadd.f32 %v503, %v527
        %529 = vdwg.mxu0
        %530 = vmatpush.xpose.msra.mxu0 %v468
        %531 = vmatpush.xpose.msra.mxu0 %v466
        %532 = vmatpush.xpose.msra.mxu0 %v464
        %533 = vmatpush.xpose.msra.mxu0 %v462
        %534 = vmatpush.xpose.msra.mxu0 %v460
        %535 = vmatpush.xpose.msra.mxu0 %v458
        %536 = vmatpush.xpose.msra.mxu0 %v456
        %537 = vmatpush.xpose.msra.mxu0 %v454
        %538 = vmatpush.xpose.msra.mxu0 %v452
        %539 = vmatpush.xpose.msra.mxu0 %v450
        %540 = vmatpush.xpose.msra.mxu0 %v448
        %541 = vmatpush.xpose.msra.mxu0 %v446
        %542 = vmatpush.xpose.msra.mxu0 %v444
        %543 = vmatpush.xpose.msra.mxu0 %v442
        %544 = vmatpush.xpose.msra.mxu0 %v440
        %545 = vmatpush.xpose.msra.mxu0 %v438
        %546 = vmatmul.f32.gmra.mxu0 %v434
        %v547 = vpop.f32.mrf.mxu0
        %v548 = vadd.f32 %v525, %v547
        %549 = vmatmul.f32.gmra.mxu0 %v436
        %v550 = vpop.f32.mrf.mxu0
        %v551 = vadd.f32 %v528, %v550
        %552 = vdwg.mxu0
        %553 = vmatpush.xpose.msra.mxu0 %v499
        %554 = vmatpush.xpose.msra.mxu0 %v497
        %555 = vmatpush.xpose.msra.mxu0 %v495
        %556 = vmatpush.xpose.msra.mxu0 %v493
        %557 = vmatpush.xpose.msra.mxu0 %v491
        %558 = vmatpush.xpose.msra.mxu0 %v489
        %559 = vmatpush.xpose.msra.mxu0 %v487
        %560 = vmatpush.xpose.msra.mxu0 %v485
        %561 = vmatpush.xpose.msra.mxu0 %v483
        %562 = vmatpush.xpose.msra.mxu0 %v481
        %563 = vmatpush.xpose.msra.mxu0 %v479
        %564 = vmatpush.xpose.msra.mxu0 %v477
        %565 = vmatpush.xpose.msra.mxu0 %v475
        %566 = vmatpush.xpose.msra.mxu0 %v473
        %567 = vmatpush.xpose.msra.mxu0 %v471
        %568 = vmatpush.xpose.msra.mxu0 %v469
        %569 = vmatmul.f32.gmra.mxu0 %v433
        %v570 = vpop.f32.mrf.mxu0
        %v571 = vadd.f32 %v504, %v570
        %572 = vmatmul.f32.gmra.mxu0 %v435
        %v573 = vpop.f32.mrf.mxu0
        %v574 = vadd.f32 %v504, %v573
        %575 = vdwg.mxu0
        %576 = vmatpush.xpose.msra.mxu0 %v500
        %577 = vmatpush.xpose.msra.mxu0 %v498
        %578 = vmatpush.xpose.msra.mxu0 %v496
        %579 = vmatpush.xpose.msra.mxu0 %v494
        %580 = vmatpush.xpose.msra.mxu0 %v492
        %581 = vmatpush.xpose.msra.mxu0 %v490
        %582 = vmatpush.xpose.msra.mxu0 %v488
        %583 = vmatpush.xpose.msra.mxu0 %v486
        %584 = vmatpush.xpose.msra.mxu0 %v484
        %585 = vmatpush.xpose.msra.mxu0 %v482
        %586 = vmatpush.xpose.msra.mxu0 %v480
        %587 = vmatpush.xpose.msra.mxu0 %v478
        %588 = vmatpush.xpose.msra.mxu0 %v476
        %589 = vmatpush.xpose.msra.mxu0 %v474
        %590 = vmatpush.xpose.msra.mxu0 %v472
        %591 = vmatpush.xpose.msra.mxu0 %v470
        %592 = vmatmul.f32.gmra.mxu0 %v434
        %v593 = vpop.f32.mrf.mxu0
        %v594 = vadd.f32 %v571, %v593
        %595 = vmatmul.f32.gmra.mxu0 %v436
        %v596 = vpop.f32.mrf.mxu0
        %v597 = vadd.f32 %v574, %v596
        %598 = vdwg.mxu0
        %v599 = vtanh.pop %v548
        %v600 = vtanh.pop %v594
        %v601 = vtanh.pop %v551
        %v602 = vtanh.pop %v597
        %603 = vst [vmem:[%s350] sm:$0xff] %v599
        %604 = vst [vmem:[%s350 + $0x8] sm:$0xff] %v600
        %605 = vst [vmem:[%s350 + $0x10] sm:$0xff] %v601
        %606 = vst [vmem:[%s350 + $0x18] sm:$0xff] %v602
        %s607 = sand.u32 %s166, 1
        %s608 = scalar_lea.sflag [#allocation4], %s607
        %s609 = sand.u32 %s166, 1
        %s610 = smul.addr %s609, 32
        %s611 = scalar_lea.vmem [#allocation11], %s610
        // Predicated region
        $region61: #{tpu_custom_call.1} parent=39 // pred_check
          %p612 = pneg %p176
        $region62: #{tpu_custom_call.1} parent=39 // pred_check_branch
          %614 = sbr.rel (%p612) target = $region64
        $region63: #{tpu_custom_call.1} parent=39 // pred_region
          %s615 = smul.u32 2, %s28
          %s616 = smul.u32 2, %s29
          %618 = vsyncadd %s608, 0
          %s619 = smul.addr %s615, 4
          %s620 = sadd.s32 %s616, %s619
          %s621 = smul.addr %s620, 8
          %s622 = scalar_lea.hbm %s5, %s621
          %s623 = sshll.u32 %s611, 4
          %s624 = int_to_ptr.vmem [resolvable:$true] %s623
          %s625 = sshll.u32 %s622, 4
          %s626 = int_to_ptr.hbm [resolvable:$true] %s625
          %631 = dma.vmem_to_hbm [thread:$0]  %s624, 512, %s626, %s608, 256, 512, 16
        $region64: #{tpu_custom_call.1} parent=39 // pred_fallthru
          _
      $region40: #{tpu_custom_call.1} parent=5 // pred_fallthru
        _
      %p632 = scmp.le.s32.totalorder 2, %s19
      // Predicated region
      $region65: #{tpu_custom_call.1} parent=5 // pred_check
        %p633 = pneg %p632
      $region66: #{tpu_custom_call.1} parent=5 // pred_check_branch
        %635 = sbr.rel (%p633) target = $region68
      $region67: #{tpu_custom_call.1} parent=5 // pred_region
        %s636 = ssub.s32 %s19, 2
        // Predicated region
        $region69: #{tpu_custom_call.1} parent=67 // pred_check
          %p637 = pneg %p182
        $region70: #{tpu_custom_call.1} parent=67 // pred_check_branch
          %639 = sbr.rel (%p637) target = $region72
        $region71: #{tpu_custom_call.1} parent=67 // pred_region
          %s640 = sand.u32 %s167, 1
          %s641 = scalar_lea.sflag [#allocation4], %s640
          %s642 = sand.u32 %s167, 1
          %s643 = smul.addr %s642, 32
          %s644 = scalar_lea.vmem [#allocation11], %s643
          %646 = dma.done %s641, 512
        $region72: #{tpu_custom_call.1} parent=67 // pred_fallthru
          _
      $region68: #{tpu_custom_call.1} parent=5 // pred_fallthru
        _
    $region6: #{tpu_custom_call.1} parent=1 // loop_footer
      %s23 = sadd.s32 1, %s19
    $region7: #{tpu_custom_call.1} parent=1 // loop_footer_branch
      %18 = sbr.rel target = $region3
    $region8: #{tpu_custom_call.1} parent=1 // loop_exit
      _
    %647 = vsyncpa [#allocation3], 1
    %s648 = scalar_lea.sflag [#allocation3], 1
    %649 = vsyncpa %s648, 1
    %650 = vsyncpa [#allocation6], 1
    %651 = vsyncpa [#allocation9], 1
    %s652 = scalar_lea.sflag [#allocation9], 1
    %653 = vsyncpa %s652, 1
    %654 = vsyncpa [#allocation4], 1
    %s655 = scalar_lea.sflag [#allocation4], 1
    %656 = vsyncpa %s655, 1

</llo_original>
